<compile_context>
chip_gen: v6e
topology: v6e:2x2x1
jax: 0.10.0
libtpu: 0.0.40
codegen_flags: <defaults>
</compile_context>

<pallas_src>
import functools

import jax
import jax.numpy as jnp
from jax.experimental import pallas as pl
from jax.experimental.pallas import tpu as pltpu

LANES = 128


def _round_up(x, m):
    return (x + m - 1) // m * m


def gnn_kernel(a_ref, x_ref, w1_ref, wsb_ref, o_ref, *, h):
    """Fused 2-layer SAGE(mean) + sigmoid for one graph of the batch.

    a_ref  : (1, N, N)    bf16 row-normalized adjacency
    x_ref  : (1, N, Fp)   bf16 zero-padded node features
    w1_ref : (Fp, 2H)     bf16 packed [w1l | w1r]
    wsb_ref: (Rs, 2H)     f32  rows 0:H = [w2l, w2r, 0...]; row H = [b1 (H lanes), b2, 0...]
    o_ref  : (1, N, 128)  f32  lane-dense output; column 0 carries sigmoid(h2)
    """
    a = a_ref[0]                         # [N, N]
    x = x_ref[0]                         # [N, Fp]
    w1 = w1_ref[...]                     # [Fp, 2H]
    wsb = wsb_ref[...]                   # [Rs, 2H]

    w2 = wsb[0:h, 0:2]                   # [H, 2] = [w2l | w2r]
    b1 = wsb[h:h + 1, 0:h]               # [1, H]   (row H is 8-aligned since H=32)
    b2 = wsb[h:h + 1, h:h + 1]           # [1, 1]

    # ---- layer 1: SAGEConv(F -> H, mean)  h1 = relu(A @ (X@w1l) + X@w1r + b1)
    xw = jnp.dot(x, w1, preferred_element_type=jnp.float32)            # [N, 2H]
    agg1 = jnp.dot(a, xw[:, 0:h].astype(jnp.bfloat16),
                   preferred_element_type=jnp.float32)                 # [N, H]
    h1 = jnp.maximum(agg1 + xw[:, h:2 * h] + b1, 0.0)                  # relu

    # ---- layer 2: SAGEConv(H -> 1, mean)  h2 = A @ (h1@w2l) + h1@w2r + b2
    hw = jnp.dot(h1, w2, preferred_element_type=jnp.float32)           # [N, 2]
    agg2 = jnp.dot(a, hw[:, 0:1].astype(jnp.bfloat16),
                   preferred_element_type=jnp.float32)                 # [N, 1]
    h2 = agg2 + hw[:, 1:2] + b2                                        # [N, 1]

    # ---- torch.sigmoid, stored lane-dense (column 0 carries the result).
    o_ref[0] = jnp.broadcast_to(jax.nn.sigmoid(h2), o_ref.shape[1:])


def prepare_params(params, num_attributes):
    """One-time parameter packing (hoisted out of the per-call hot path)."""
    f = num_attributes
    h = params["w1l"].shape[1]
    fp = _round_up(f, 64)                # lane/sublane-friendly feature pad
    rs = _round_up(h + 1, 8)             # 8-aligned leading dim for small block

    # Packed layer-1 weights [w1l | w1r], zero-padded rows, cast to bf16.
    w1 = jnp.zeros((fp, 2 * h), jnp.float32)
    w1 = w1.at[:f, :h].set(params["w1l"]).at[:f, h:].set(params["w1r"])
    w1_bf16 = w1.astype(jnp.bfloat16)

    # Small f32 block: w2l/w2r columns + biases on an 8-aligned row.
    wsb = jnp.zeros((rs, 2 * h), jnp.float32)
    wsb = wsb.at[:h, 0].set(params["w2l"][:, 0])
    wsb = wsb.at[:h, 1].set(params["w2r"][:, 0])
    wsb = wsb.at[h, 0:h].set(params["b1"][0])
    wsb = wsb.at[h, h].set(params["b2"][0, 0])

    return {"w1": w1_bf16, "wsb": wsb, "h": h, "fp": fp}


def prepare_graphs(x, edge_index, fp):
    """Build bf16 row-normalized adjacency + bf16 zero-padded features.

    x: [B, N, F] f32, edge_index: [B, 2, E] int32 (row 0 = src, row 1 = dst).
    Duplicate edges are counted (weighted mean), matching PyG scatter-mean;
    isolated nodes aggregate to 0 via max(deg, 1).
    """
    B, N, F = x.shape

    def one(xi, ei):
        src, dst = ei[0], ei[1]
        adj = jnp.zeros((N, N), jnp.float32).at[dst, src].add(1.0)
        deg = jnp.sum(adj, axis=1, keepdims=True)
        a = (adj / jnp.maximum(deg, 1.0)).astype(jnp.bfloat16)
        xp = jnp.zeros((N, fp), jnp.bfloat16).at[:, :F].set(xi.astype(jnp.bfloat16))
        return a, xp

    return jax.vmap(one)(x, edge_index)


@functools.partial(jax.jit, static_argnames=("h",))
def gnn_pallas_forward(a, x_p, w1, wsb, *, h):
    """a: [B,N,N] bf16, x_p: [B,N,Fp] bf16, w1: [Fp,2H] bf16, wsb: [Rs,2H] f32."""
    B, N, _ = a.shape
    fp = x_p.shape[-1]
    rs = wsb.shape[0]
    kernel = functools.partial(gnn_kernel, h=h)

    out_pad = pl.pallas_call(
        kernel,
        out_shape=jax.ShapeDtypeStruct((B, N, LANES), jnp.float32),
        grid_spec=pltpu.PrefetchScalarGridSpec(
            num_scalar_prefetch=0,
            grid=(B,),
            in_specs=[
                pl.BlockSpec((1, N, N), lambda b: (b, 0, 0)),
                pl.BlockSpec((1, N, fp), lambda b: (b, 0, 0)),
                pl.BlockSpec((fp, 2 * h), lambda b: (0, 0)),
                pl.BlockSpec((rs, 2 * h), lambda b: (0, 0)),
            ],
            out_specs=pl.BlockSpec((1, N, LANES), lambda b: (b, 0, 0)),
        ),
        compiler_params=pltpu.CompilerParams(
            dimension_semantics=("parallel",),   # batch axis: shards across TCs on v7x
        ),
    )(a, x_p, w1, wsb)

    return out_pad[:, :, 0:1]                    # lane-dense block -> [B, N, 1]


def init_params(key, num_attributes=57, num_neurons1=32, num_classes=1):
    k = jax.random.split(key, 6)
    s1 = 1.0 / jnp.sqrt(num_attributes)
    s2 = 1.0 / jnp.sqrt(num_neurons1)
    return {
        "w1l": jax.random.uniform(k[0], (num_attributes, num_neurons1), jnp.float32, -s1, s1),
        "w1r": jax.random.uniform(k[1], (num_attributes, num_neurons1), jnp.float32, -s1, s1),
        "b1":  jax.random.uniform(k[2], (1, num_neurons1), jnp.float32, -s1, s1),
        "w2l": jax.random.uniform(k[3], (num_neurons1, num_classes), jnp.float32, -s2, s2),
        "w2r": jax.random.uniform(k[4], (num_neurons1, num_classes), jnp.float32, -s2, s2),
        "b2":  jax.random.uniform(k[5], (1, num_classes), jnp.float32, -s2, s2),
    }


def reference_forward(x, edge_index, params):
    """Pure-JAX f32 reference (PyG SAGEConv mean semantics) for one graph."""
    N = x.shape[0]
    src, dst = edge_index[0], edge_index[1]
    adj = jnp.zeros((N, N), jnp.float32).at[dst, src].add(1.0)
    deg = jnp.sum(adj, axis=1, keepdims=True)
    a = adj / jnp.maximum(deg, 1.0)
    h1 = jax.nn.relu(a @ (x @ params["w1l"]) + x @ params["w1r"] + params["b1"])
    h2 = a @ (h1 @ params["w2l"]) + h1 @ params["w2r"] + params["b2"]
    return jax.nn.sigmoid(h2)


if __name__ == "__main__":
    key = jax.random.PRNGKey(0)
    k_x, k_e, k_p = jax.random.split(key, 3)

    # Small batched example: 4 graphs, 64 nodes, 57 node attributes, 256 edges.
    B, N, F, E = 4, 64, 57, 256
    x = jax.random.normal(k_x, (B, N, F), jnp.float32)
    edge_index = jax.random.randint(k_e, (B, 2, E), 0, N, jnp.int32)
    params = init_params(k_p, num_attributes=F, num_neurons1=32, num_classes=1)

    prepared = prepare_params(params, F)          # one-time, hoisted out of hot path
    a_norm, x_p = prepare_graphs(x, edge_index, prepared["fp"])

    out = gnn_pallas_forward(a_norm, x_p, prepared["w1"], prepared["wsb"],
                             h=prepared["h"])
    out = jax.block_until_ready(out)

    assert out.shape == (B, N, 1)
    assert bool(jnp.all((out >= 0.0) & (out <= 1.0)))

    # Tolerance check vs. f32 reference (bf16 A / X / W1 introduce ~1e-3 logit error).
    ref = jnp.stack([reference_forward(x[b], edge_index[b], params) for b in range(B)])
    max_err = float(jnp.max(jnp.abs(out - ref)))
    assert max_err < 2e-2, f"max abs error vs f32 reference: {max_err}"

    print("KERNEL_OK")
</pallas_src>

<mosaic_0001>
module attributes {stable_mosaic.version = 11 : i64} {
  func.func @gnn_kernel(%arg0: i32, %arg1: memref<1x64x64xbf16, #tpu.memory_space<vmem>>, %arg2: memref<1x64x64xbf16, #tpu.memory_space<vmem>>, %arg3: memref<64x64xbf16, #tpu.memory_space<vmem>>, %arg4: memref<40x64xf32, #tpu.memory_space<vmem>>, %arg5: memref<1x64x128xf32, #tpu.memory_space<vmem>>) attributes {dimension_semantics = [#tpu.dimension_semantics<parallel>], iteration_bounds = array<i64: 4>, scalar_prefetch = 0 : i64, scratch_operands = 0 : i64, tpu.core_type = #tpu.core_type<tc>, window_params = [{transform_indices = @transform_0, window_bounds = array<i64: 1, 64, 64>}, {transform_indices = @transform_1, window_bounds = array<i64: 1, 64, 64>}, {pipeline_mode = #tpu.pipeline_mode<synchronous>, transform_indices = @transform_2, window_bounds = array<i64: 64, 64>}, {pipeline_mode = #tpu.pipeline_mode<synchronous>, transform_indices = @transform_3, window_bounds = array<i64: 40, 64>}, {transform_indices = @transform_4, window_bounds = array<i64: 1, 64, 128>}]} {
    %c0 = arith.constant 0 : index
    %c0_0 = arith.constant 0 : index
    %c0_1 = arith.constant 0 : index
    %0 = vector.load %arg1[%c0, %c0_0, %c0_1] : memref<1x64x64xbf16, #tpu.memory_space<vmem>>, vector<1x64x64xbf16>
    %1 = vector.shape_cast %0 : vector<1x64x64xbf16> to vector<64x64xbf16>
    %c0_2 = arith.constant 0 : index
    %c0_3 = arith.constant 0 : index
    %c0_4 = arith.constant 0 : index
    %2 = vector.load %arg2[%c0_2, %c0_3, %c0_4] : memref<1x64x64xbf16, #tpu.memory_space<vmem>>, vector<1x64x64xbf16>
    %3 = vector.shape_cast %2 : vector<1x64x64xbf16> to vector<64x64xbf16>
    %c0_5 = arith.constant 0 : index
    %c0_6 = arith.constant 0 : index
    %4 = vector.load %arg3[%c0_5, %c0_6] : memref<64x64xbf16, #tpu.memory_space<vmem>>, vector<64x64xbf16>
    %c0_7 = arith.constant 0 : index
    %c0_8 = arith.constant 0 : index
    %5 = vector.load %arg4[%c0_7, %c0_8] : memref<40x64xf32, #tpu.memory_space<vmem>>, vector<40x64xf32>
    %6 = vector.extract_strided_slice %5 {offsets = [0, 0], sizes = [32, 2], strides = [1, 1]} : vector<40x64xf32> to vector<32x2xf32>
    %7 = vector.extract_strided_slice %5 {offsets = [32, 0], sizes = [1, 32], strides = [1, 1]} : vector<40x64xf32> to vector<1x32xf32>
    %8 = vector.extract_strided_slice %5 {offsets = [32, 32], sizes = [1, 1], strides = [1, 1]} : vector<40x64xf32> to vector<1x1xf32>
    %cst = arith.constant dense<0.000000e+00> : vector<64x64xf32>
    %9 = tpu.matmul %3, %4, %cst {dimension_numbers = #tpu.dot_dimension_numbers<[1], [0], [0], [1], [0, 0, 1, 1], [], []>} : vector<64x64xbf16>, vector<64x64xbf16>, vector<64x64xf32> -> vector<64x64xf32>
    %10 = vector.extract_strided_slice %9 {offsets = [0, 0], sizes = [64, 32], strides = [1, 1]} : vector<64x64xf32> to vector<64x32xf32>
    %11 = arith.truncf %10 : vector<64x32xf32> to vector<64x32xbf16>
    %cst_9 = arith.constant dense<0.000000e+00> : vector<64x32xf32>
    %12 = tpu.matmul %1, %11, %cst_9 {dimension_numbers = #tpu.dot_dimension_numbers<[1], [0], [0], [1], [0, 0, 1, 1], [], []>} : vector<64x64xbf16>, vector<64x32xbf16>, vector<64x32xf32> -> vector<64x32xf32>
    %13 = vector.extract_strided_slice %9 {offsets = [0, 32], sizes = [64, 32], strides = [1, 1]} : vector<64x64xf32> to vector<64x32xf32>
    %14 = arith.addf %12, %13 : vector<64x32xf32>
    %15 = vector.broadcast %7 : vector<1x32xf32> to vector<64x32xf32>
    %16 = arith.addf %14, %15 : vector<64x32xf32>
    %cst_10 = arith.constant 0.000000e+00 : f32
    %17 = vector.broadcast %cst_10 : f32 to vector<64x32xf32>
    %18 = arith.maximumf %16, %17 : vector<64x32xf32>
    %cst_11 = arith.constant dense<0.000000e+00> : vector<64x2xf32>
    %19 = tpu.matmul %18, %6, %cst_11 {dimension_numbers = #tpu.dot_dimension_numbers<[1], [0], [0], [1], [0, 0, 1, 1], [], []>} : vector<64x32xf32>, vector<32x2xf32>, vector<64x2xf32> -> vector<64x2xf32>
    %20 = vector.extract_strided_slice %19 {offsets = [0, 0], sizes = [64, 1], strides = [1, 1]} : vector<64x2xf32> to vector<64x1xf32>
    %21 = arith.truncf %20 : vector<64x1xf32> to vector<64x1xbf16>
    %cst_12 = arith.constant dense<0.000000e+00> : vector<64x1xf32>
    %22 = tpu.matmul %1, %21, %cst_12 {dimension_numbers = #tpu.dot_dimension_numbers<[1], [0], [0], [1], [0, 0, 1, 1], [], []>} : vector<64x64xbf16>, vector<64x1xbf16>, vector<64x1xf32> -> vector<64x1xf32>
    %23 = vector.extract_strided_slice %19 {offsets = [0, 1], sizes = [64, 1], strides = [1, 1]} : vector<64x2xf32> to vector<64x1xf32>
    %24 = arith.addf %22, %23 : vector<64x1xf32>
    %25 = vector.broadcast %8 : vector<1x1xf32> to vector<64x1xf32>
    %26 = arith.addf %24, %25 : vector<64x1xf32>
    %27 = arith.negf %26 : vector<64x1xf32>
    %28 = math.exp %27 : vector<64x1xf32>
    %cst_13 = arith.constant 1.000000e+00 : f32
    %29 = vector.broadcast %cst_13 : f32 to vector<64x1xf32>
    %30 = arith.addf %29, %28 : vector<64x1xf32>
    %31 = arith.divf %29, %30 : vector<64x1xf32>
    %32 = vector.shape_cast %31 : vector<64x1xf32> to vector<64x1xf32>
    %33 = vector.broadcast %32 : vector<64x1xf32> to vector<64x128xf32>
    %c0_14 = arith.constant 0 : index
    %c0_15 = arith.constant 0 : index
    %c0_16 = arith.constant 0 : index
    %34 = vector.load %arg5[%c0_14, %c0_15, %c0_16] : memref<1x64x128xf32, #tpu.memory_space<vmem>>, vector<1x64x128xf32>
    %35 = vector.shape_cast %34 : vector<1x64x128xf32> to vector<64x128xf32>
    %36 = vector.shape_cast %33 : vector<64x128xf32> to vector<1x64x128xf32>
    tpu.vector_store %arg5[%c0_14, %c0_15, %c0_16], %36 {strides = array<i32>} : memref<1x64x128xf32, #tpu.memory_space<vmem>>, vector<1x64x128xf32>,
    return
  }
  func.func @transform_0(%arg0: i32) -> (i32, i32, i32) {
    %c0_i32 = arith.constant 0 : i32
    %c0_i32_0 = arith.constant 0 : i32
    %c0_i32_1 = arith.constant 0 : i32
    return %arg0, %c0_i32, %c0_i32_0 : i32, i32, i32
  }
  func.func @transform_1(%arg0: i32) -> (i32, i32, i32) {
    %c0_i32 = arith.constant 0 : i32
    %c0_i32_0 = arith.constant 0 : i32
    %c0_i32_1 = arith.constant 0 : i32
    return %arg0, %c0_i32, %c0_i32_0 : i32, i32, i32
  }
  func.func @transform_2(%arg0: i32) -> (i32, i32) {
    %c0_i32 = arith.constant 0 : i32
    %c0_i32_0 = arith.constant 0 : i32
    %c0_i32_1 = arith.constant 0 : i32
    return %c0_i32, %c0_i32_0 : i32, i32
  }
  func.func @transform_3(%arg0: i32) -> (i32, i32) {
    %c0_i32 = arith.constant 0 : i32
    %c0_i32_0 = arith.constant 0 : i32
    %c0_i32_1 = arith.constant 0 : i32
    return %c0_i32, %c0_i32_0 : i32, i32
  }
  func.func @transform_4(%arg0: i32) -> (i32, i32, i32) {
    %c0_i32 = arith.constant 0 : i32
    %c0_i32_0 = arith.constant 0 : i32
    %c0_i32_1 = arith.constant 0 : i32
    return %arg0, %c0_i32, %c0_i32_0 : i32, i32, i32
  }
}

</mosaic_0001>

<llo_original>
// kernel: gnn_pallas_forward.1
$region0: #{gnn_pallas_forward.1}
  #allocation0 [shape = 'u32[]', space=smem, size = 0x4, offset = 0x4, fixed_abs, tag = 'smem constant byte address 0x4 - core index']
  #allocation1 [shape = 'u32[144,128]{1,0:T(1,128)}', space=vmem, size = 0x12000, scoped, tag = 'internal scratch']
  %s0 = inlined_call_operand.hbm [shape: bf16[4,64,64], index: 0, kind: input, shape index: {}]
  %s1 = inlined_call_operand.hbm [shape: bf16[4,64,64], index: 1, kind: input, shape index: {}]
  %s2 = inlined_call_operand.hbm [shape: bf16[64,64], index: 2, kind: input, shape index: {}]
  %s3 = inlined_call_operand.hbm [shape: f32[40,64], index: 3, kind: input, shape index: {}]
  %s4 = inlined_call_operand.vmem [shape: f32[4,64,128], index: 4, kind: output, shape index: {}]
  %s5 = sld [smem:[#allocation0]]
  $region65: #{gnn_pallas_forward.1} parent=0
    _
  %s7 = ssub.s32 1, %s5
  %s8 = scalar_select 0, %s7, %s5
  $region1: #{gnn_pallas_forward.1} parent=0
    #allocation2 [shape = 'u8[32768]{0}', space=vmem, size = 0x8000, scoped, tag = 'input window, operand 0']
    #allocation3 [shape = 's32[2]{0}', space=sflag, size = 0x8, scoped, tag = 'scoped memory for gnn_pallas_forward.1']
    #allocation4 [shape = 'u8[32768]{0}', space=vmem, size = 0x8000, scoped, tag = 'input window, operand 1']
    #allocation5 [shape = 's32[2]{0}', space=sflag, size = 0x8, scoped, tag = 'scoped memory for gnn_pallas_forward.1']
    #allocation6 [shape = 'u8[16384]{0}', space=vmem, size = 0x4000, scoped, tag = 'input window, operand 2, single buffered']
    #allocation7 [shape = 'u8[20480]{0}', space=vmem, size = 0x5000, scoped, tag = 'input window, operand 3, single buffered']
    #allocation8 [shape = 's32[1]{0}', space=sflag, size = 0x4, scoped, tag = 'scoped memory for gnn_pallas_forward.1']
    %9 = vsyncpa [#allocation3], 0
    %s10 = scalar_lea.sflag [#allocation3], 1
    %11 = vsyncpa %s10, 0
    %12 = vsyncpa [#allocation5], 0
    %s13 = scalar_lea.sflag [#allocation5], 1
    %14 = vsyncpa %s13, 0
    %15 = vsyncpa [#allocation8], 0
    loop: start=0, step=1, limit=6
    $region2: #{gnn_pallas_forward.1} parent=1 // loop_pre_header
      _
    $region3: #{gnn_pallas_forward.1} parent=1 // loop_header
      %s17 = sphi 0, %s21
      %p18 = scmp.ge.s32.totalorder %s17, 6
      %s27 = sphi 0, %s29
      %s30 = sphi 0, %s27
      %s31 = sphi 0, %s30
      %s47 = sphi 0, %s31
      %s53 = sphi 0, %s55
      %s56 = sphi 0, %s53
      %s57 = sphi 0, %s56
      %s73 = sphi 0, %s57
      %s77 = sphi 0, %s77
      %s79 = sphi 0, %s77
      %s80 = sphi 0, %s79
      %s94 = sphi 0, %s80
      %s98 = sphi 0, %s98
      %s100 = sphi 0, %s98
      %s101 = sphi 0, %s100
      %s115 = sphi 0, %s101
      %s121 = sphi 0, %s123
      %s124 = sphi 0, %s121
      %s125 = sphi 0, %s124
      %s141 = sphi 0, %s125
    $region4: #{gnn_pallas_forward.1} parent=1 // loop_header_branch
      %20 = sbr.rel (%p18) target = $region8
    $region5: #{gnn_pallas_forward.1} parent=1 // loop_body
      %s22 = ssub.s32 %s17, 1
      %s23 = ssub.s32 %s17, 2
      %s24 = sadd.s32 %s17, 1
      %s25 = ssub.s32 %s17, %s24
      %p26 = scmp.eq.s32.totalorder %s25, 0
      %s28 = sadd.s32 %s27, 1
      %s29 = scalar_select %p26, %s27, %s28
      %p32 = pneg %p26
      %p33 = scmp.eq.s32.totalorder %s17, 3
      %p34 = por %p32, %p33
      %p35 = scmp.ne.s32.totalorder %s27, %s30
      %p36 = scmp.eq.s32.totalorder %s17, 0
      %p37 = por %p35, %p36
      %p38 = scmp.ne.s32.totalorder %s27, %s30
      %p39 = scmp.eq.s32.totalorder %s22, 3
      %p40 = por %p38, %p39
      %p41 = scmp.ne.s32.totalorder %s30, %s31
      %p42 = scmp.eq.s32.totalorder %s22, 0
      %p43 = por %p41, %p42
      %p44 = scmp.ne.s32.totalorder %s30, %s31
      %p45 = scmp.eq.s32.totalorder %s23, 3
      %p46 = por %p44, %p45
      %p48 = scmp.ne.s32.totalorder %s31, %s47
      %p49 = scmp.eq.s32.totalorder %s23, 0
      %p50 = por %p48, %p49
      %s51 = ssub.s32 %s17, %s24
      %p52 = scmp.eq.s32.totalorder %s51, 0
      %s54 = sadd.s32 %s53, 1
      %s55 = scalar_select %p52, %s53, %s54
      %p58 = pneg %p52
      %p59 = scmp.eq.s32.totalorder %s17, 3
      %p60 = por %p58, %p59
      %p61 = scmp.ne.s32.totalorder %s53, %s56
      %p62 = scmp.eq.s32.totalorder %s17, 0
      %p63 = por %p61, %p62
      %p64 = scmp.ne.s32.totalorder %s53, %s56
      %p65 = scmp.eq.s32.totalorder %s22, 3
      %p66 = por %p64, %p65
      %p67 = scmp.ne.s32.totalorder %s56, %s57
      %p68 = scmp.eq.s32.totalorder %s22, 0
      %p69 = por %p67, %p68
      %p70 = scmp.ne.s32.totalorder %s56, %s57
      %p71 = scmp.eq.s32.totalorder %s23, 3
      %p72 = por %p70, %p71
      %p74 = scmp.ne.s32.totalorder %s57, %s73
      %p75 = scmp.eq.s32.totalorder %s23, 0
      %p76 = por %p74, %p75
      %s78 = sadd.s32 %s77, 1
      %p81 = scmp.eq.s32.totalorder %s17, 3
      %p82 = scmp.ne.s32.totalorder %s77, %s79
      %p83 = scmp.eq.s32.totalorder %s17, 0
      %p84 = por %p82, %p83
      %p85 = scmp.ne.s32.totalorder %s77, %s79
      %p86 = scmp.eq.s32.totalorder %s22, 3
      %p87 = por %p85, %p86
      %p88 = scmp.ne.s32.totalorder %s79, %s80
      %p89 = scmp.eq.s32.totalorder %s22, 0
      %p90 = por %p88, %p89
      %p91 = scmp.ne.s32.totalorder %s79, %s80
      %p92 = scmp.eq.s32.totalorder %s23, 3
      %p93 = por %p91, %p92
      %p95 = scmp.ne.s32.totalorder %s80, %s94
      %p96 = scmp.eq.s32.totalorder %s23, 0
      %p97 = por %p95, %p96
      %s99 = sadd.s32 %s98, 1
      %p102 = scmp.eq.s32.totalorder %s17, 3
      %p103 = scmp.ne.s32.totalorder %s98, %s100
      %p104 = scmp.eq.s32.totalorder %s17, 0
      %p105 = por %p103, %p104
      %p106 = scmp.ne.s32.totalorder %s98, %s100
      %p107 = scmp.eq.s32.totalorder %s22, 3
      %p108 = por %p106, %p107
      %p109 = scmp.ne.s32.totalorder %s100, %s101
      %p110 = scmp.eq.s32.totalorder %s22, 0
      %p111 = por %p109, %p110
      %p112 = scmp.ne.s32.totalorder %s100, %s101
      %p113 = scmp.eq.s32.totalorder %s23, 3
      %p114 = por %p112, %p113
      %p116 = scmp.ne.s32.totalorder %s101, %s115
      %p117 = scmp.eq.s32.totalorder %s23, 0
      %p118 = por %p116, %p117
      %s119 = ssub.s32 %s17, %s24
      %p120 = scmp.eq.s32.totalorder %s119, 0
      %s122 = sadd.s32 %s121, 1
      %s123 = scalar_select %p120, %s121, %s122
      %p126 = pneg %p120
      %p127 = scmp.eq.s32.totalorder %s17, 3
      %p128 = por %p126, %p127
      %p129 = scmp.ne.s32.totalorder %s121, %s124
      %p130 = scmp.eq.s32.totalorder %s17, 0
      %p131 = por %p129, %p130
      %p132 = scmp.ne.s32.totalorder %s121, %s124
      %p133 = scmp.eq.s32.totalorder %s22, 3
      %p134 = por %p132, %p133
      %p135 = scmp.ne.s32.totalorder %s124, %s125
      %p136 = scmp.eq.s32.totalorder %s22, 0
      %p137 = por %p135, %p136
      %p138 = scmp.ne.s32.totalorder %s124, %s125
      %p139 = scmp.eq.s32.totalorder %s23, 3
      %p140 = por %p138, %p139
      %p142 = scmp.ne.s32.totalorder %s125, %s141
      %p143 = scmp.eq.s32.totalorder %s23, 0
      %p144 = por %p142, %p143
      %p145 = scmp.le.s32.totalorder 1, %s17
      %p146 = scmp.lt.s32.totalorder %s17, 5
      %p147 = pnand %p145, %p146
      %p148 = pneg %p147
      // Predicated region
      $region9: #{gnn_pallas_forward.1} parent=5 // pred_check
        _
      $region10: #{gnn_pallas_forward.1} parent=5 // pred_check_branch
        %150 = sbr.rel (%p147) target = $region12
      $region11: #{gnn_pallas_forward.1} parent=5 // pred_region
        %s151 = ssub.s32 %s17, 1
        // Predicated region
        $region13: #{gnn_pallas_forward.1} parent=11 // pred_check
          %p152 = pneg %p90
        $region14: #{gnn_pallas_forward.1} parent=11 // pred_check_branch
          %154 = sbr.rel (%p152) target = $region16
        $region15: #{gnn_pallas_forward.1} parent=11 // pred_region
          %s156 = ssub.s32 512, 512
          %157 = vsyncadd [#allocation5], %s156
          %s158 = sshll.u32 [#allocation6], 4
          %s159 = int_to_ptr.vmem [resolvable:$true] %s158
          %164 = dma.hbm_to_vmem [thread:$0]  %s2, 512, %s159, [#allocation5], 64, 64, 4
        $region16: #{gnn_pallas_forward.1} parent=11 // pred_fallthru
          _
        // Predicated region
        $region17: #{gnn_pallas_forward.1} parent=11 // pred_check
          %p165 = pneg %p111
        $region18: #{gnn_pallas_forward.1} parent=11 // pred_check_branch
          %167 = sbr.rel (%p165) target = $region20
        $region19: #{gnn_pallas_forward.1} parent=11 // pred_region
          %s169 = ssub.s32 640, 640
          %170 = vsyncadd [#allocation8], %s169
          %s171 = sshll.u32 [#allocation7], 4
          %s172 = int_to_ptr.vmem [resolvable:$true] %s171
          %177 = dma.hbm_to_vmem [thread:$0]  %s3, 640, %s172, [#allocation8], 128, 128, 8
        $region20: #{gnn_pallas_forward.1} parent=11 // pred_fallthru
          _
      $region12: #{gnn_pallas_forward.1} parent=5 // pred_fallthru
        _
      %p178 = scmp.lt.s32.totalorder %s17, 4
      // Predicated region
      $region21: #{gnn_pallas_forward.1} parent=5 // pred_check
        %p179 = pneg %p178
      $region22: #{gnn_pallas_forward.1} parent=5 // pred_check_branch
        %181 = sbr.rel (%p179) target = $region24
      $region23: #{gnn_pallas_forward.1} parent=5 // pred_region
        // Predicated region
        $region25: #{gnn_pallas_forward.1} parent=23 // pred_check
          %p182 = pneg %p37
        $region26: #{gnn_pallas_forward.1} parent=23 // pred_check_branch
          %184 = sbr.rel (%p182) target = $region28
        $region27: #{gnn_pallas_forward.1} parent=23 // pred_region
          %s185 = sand.u32 %s27, 1
          %s186 = scalar_lea.sflag [#allocation3], %s185
          %s187 = sand.u32 %s27, 1
          %s188 = smul.addr %s187, 32
          %s189 = scalar_lea.vmem [#allocation2], %s188
          %s191 = ssub.s32 512, 512
          %192 = vsyncadd %s186, %s191
          %s193 = smul.addr %s17, 8
          %s194 = smul.addr %s193, 64
          %s195 = scalar_lea.hbm %s0, %s194
          %s196 = sshll.u32 %s189, 4
          %s197 = int_to_ptr.vmem [resolvable:$true] %s196
          %202 = dma.hbm_to_vmem [thread:$0]  %s195, 512, %s197, %s186, 64, 64, 4
        $region28: #{gnn_pallas_forward.1} parent=23 // pred_fallthru
          _
        // Predicated region
        $region29: #{gnn_pallas_forward.1} parent=23 // pred_check
          %p203 = pneg %p63
        $region30: #{gnn_pallas_forward.1} parent=23 // pred_check_branch
          %205 = sbr.rel (%p203) target = $region32
        $region31: #{gnn_pallas_forward.1} parent=23 // pred_region
          %s206 = sand.u32 %s17, 1
          %s207 = scalar_lea.sflag [#allocation5], %s206
          %s208 = sand.u32 %s53, 1
          %s209 = smul.addr %s208, 32
          %s210 = scalar_lea.vmem [#allocation4], %s209
          %s212 = ssub.s32 512, 512
          %213 = vsyncadd %s207, %s212
          %s214 = smul.addr %s17, 8
          %s215 = smul.addr %s214, 64
          %s216 = scalar_lea.hbm %s1, %s215
          %s217 = sshll.u32 %s210, 4
          %s218 = int_to_ptr.vmem [resolvable:$true] %s217
          %223 = dma.hbm_to_vmem [thread:$0]  %s216, 512, %s218, %s207, 64, 64, 4
        $region32: #{gnn_pallas_forward.1} parent=23 // pred_fallthru
          _
      $region24: #{gnn_pallas_forward.1} parent=5 // pred_fallthru
        _
      %p224 = scmp.le.s32.totalorder 1, %s17
      %p225 = scmp.lt.s32.totalorder %s17, 5
      %p226 = pnand %p224, %p225
      %p227 = pneg %p226
      // Predicated region
      $region33: #{gnn_pallas_forward.1} parent=5 // pred_check
        _
      $region34: #{gnn_pallas_forward.1} parent=5 // pred_check_branch
        %229 = sbr.rel (%p226) target = $region36
      $region35: #{gnn_pallas_forward.1} parent=5 // pred_region
        %s230 = ssub.s32 %s17, 1
        %s231 = sand.u32 %s30, 1
        %s232 = scalar_lea.sflag [#allocation3], %s231
        %s233 = sand.u32 %s30, 1
        %s234 = smul.addr %s233, 32
        %s235 = scalar_lea.vmem [#allocation2], %s234
        // Predicated region
        $region37: #{gnn_pallas_forward.1} parent=35 // pred_check
          %p236 = pneg %p43
        $region38: #{gnn_pallas_forward.1} parent=35 // pred_check_branch
          %238 = sbr.rel (%p236) target = $region40
        $region39: #{gnn_pallas_forward.1} parent=35 // pred_region
          %239 = dma.done %s232, 512
        $region40: #{gnn_pallas_forward.1} parent=35 // pred_fallthru
          _
        %s240 = sand.u32 %s22, 1
        %s241 = scalar_lea.sflag [#allocation5], %s240
        %s242 = sand.u32 %s56, 1
        %s243 = smul.addr %s242, 32
        %s244 = scalar_lea.vmem [#allocation4], %s243
        // Predicated region
        $region41: #{gnn_pallas_forward.1} parent=35 // pred_check
          %p245 = pneg %p69
        $region42: #{gnn_pallas_forward.1} parent=35 // pred_check_branch
          %247 = sbr.rel (%p245) target = $region44
        $region43: #{gnn_pallas_forward.1} parent=35 // pred_region
          %248 = dma.done %s241, 512
        $region44: #{gnn_pallas_forward.1} parent=35 // pred_fallthru
          _
        // Predicated region
        $region45: #{gnn_pallas_forward.1} parent=35 // pred_check
          %p249 = pneg %p90
        $region46: #{gnn_pallas_forward.1} parent=35 // pred_check_branch
          %251 = sbr.rel (%p249) target = $region48
        $region47: #{gnn_pallas_forward.1} parent=35 // pred_region
          %252 = dma.done [#allocation5], 512
        $region48: #{gnn_pallas_forward.1} parent=35 // pred_fallthru
          _
        // Predicated region
        $region49: #{gnn_pallas_forward.1} parent=35 // pred_check
          %p253 = pneg %p111
        $region50: #{gnn_pallas_forward.1} parent=35 // pred_check_branch
          %255 = sbr.rel (%p253) target = $region52
        $region51: #{gnn_pallas_forward.1} parent=35 // pred_region
          %256 = dma.done [#allocation8], 640
        $region52: #{gnn_pallas_forward.1} parent=35 // pred_fallthru
          _
        %s257 = sand.u32 %s30, 1
        %s258 = scalar_lea.sflag [#allocation3], %s257
        %s259 = sand.u32 %s30, 1
        %s260 = smul.addr %s259, 32
        %s261 = scalar_lea.vmem [#allocation2], %s260
        %p262 = pneg %p43
        %p263 = pneg %p40
        %s264 = sand.u32 %s22, 1
        %s265 = scalar_lea.sflag [#allocation5], %s264
        %s266 = sand.u32 %s56, 1
        %s267 = smul.addr %s266, 32
        %s268 = scalar_lea.vmem [#allocation4], %s267
        %p269 = pneg %p69
        %p270 = pneg %p66
        %p271 = pneg %p90
        %p272 = pneg %p87
        %p273 = pneg %p111
        %p274 = pneg %p108
        %p275 = pneg %p137
        %p276 = pneg %p134
        %p277 = scmp.lt.s32.totalorder %s22, 3
        %s278 = scalar_select %p277, %s22, 3
        %s279 = smul.addr %s278, 8
        %s280 = smul.addr %s279, 8
        %s281 = scalar_lea.vmem %s4, %s280
        %p282 = scmp.lt.s32.totalorder %s22, 3
        %s283 = scalar_select %p282, %s22, 3
        %s284 = smul.addr %s283, 8
        %s285 = smul.addr %s284, 8
        %s286 = scalar_lea.vmem %s4, %s285
        %v288 = vld [vmem:[%s235] sm:$0xf]
        %v289 = vld [vmem:[%s235 + $0x4] sm:$0xf]
        %v290 = vld [vmem:[%s235 + $0x8] sm:$0xf]
        %v291 = vld [vmem:[%s235 + $0xc] sm:$0xf]
        %v292 = vld [vmem:[%s235 + $0x10] sm:$0xf]
        %v293 = vld [vmem:[%s235 + $0x14] sm:$0xf]
        %v294 = vld [vmem:[%s235 + $0x18] sm:$0xf]
        %v295 = vld [vmem:[%s235 + $0x1c] sm:$0xf]
        %v296 = vld [vmem:[%s244] sm:$0xf]
        %v297 = vld [vmem:[%s244 + $0x4] sm:$0xf]
        %v298 = vld [vmem:[%s244 + $0x8] sm:$0xf]
        %v299 = vld [vmem:[%s244 + $0xc] sm:$0xf]
        %v300 = vld [vmem:[%s244 + $0x10] sm:$0xf]
        %v301 = vld [vmem:[%s244 + $0x14] sm:$0xf]
        %v302 = vld [vmem:[%s244 + $0x18] sm:$0xf]
        %v303 = vld [vmem:[%s244 + $0x1c] sm:$0xf]
        %v304 = vld [vmem:[#allocation6] sm:$0xf]
        %v305 = vld [vmem:[#allocation6 + $0x4] sm:$0xf]
        %v306 = vld [vmem:[#allocation6 + $0x8] sm:$0xf]
        %v307 = vld [vmem:[#allocation6 + $0xc] sm:$0xf]
        %v308 = vld [vmem:[#allocation6 + $0x10] sm:$0xf]
        %v309 = vld [vmem:[#allocation6 + $0x14] sm:$0xf]
        %v310 = vld [vmem:[#allocation6 + $0x18] sm:$0xf]
        %v311 = vld [vmem:[#allocation6 + $0x1c] sm:$0xf]
        %v312 = vld [vmem:[#allocation7] sm:$0xff]
        %v313 = vld [vmem:[#allocation7 + $0x8] sm:$0xff]
        %v314 = vld [vmem:[#allocation7 + $0x10] sm:$0xff]
        %v315 = vld [vmem:[#allocation7 + $0x18] sm:$0xff]
        %v316 = vld [vmem:[#allocation7 + $0x20] sm:$0xff]
        %v325 = vunpack.c.l.b16 %v296
        %v326 = vunpack.c.l.b16 %v297
        %v327 = vunpack.c.l.b16 %v298
        %v328 = vunpack.c.l.b16 %v299
        %v329 = vunpack.c.l.b16 %v300
        %v330 = vunpack.c.l.b16 %v301
        %v331 = vunpack.c.l.b16 %v302
        %v332 = vunpack.c.l.b16 %v303
        %v333 = vpack.c.b16 %v326, %v325
        %v334 = vpack.c.b16 %v328, %v327
        %v335 = vpack.c.b16 %v330, %v329
        %v336 = vpack.c.b16 %v332, %v331
        %v345 = vunpack.c.l.b16 %v304
        %v346 = vunpack.c.l.b16 %v305
        %v347 = vunpack.c.l.b16 %v306
        %v348 = vunpack.c.l.b16 %v307
        %v349 = vunpack.c.l.b16 %v308
        %v350 = vunpack.c.l.b16 %v309
        %v351 = vunpack.c.l.b16 %v310
        %v352 = vunpack.c.l.b16 %v311
        %v353 = vpack.c.b16 %v346, %v345
        %v354 = vpack.c.b16 %v348, %v347
        %v355 = vpack.c.b16 %v350, %v349
        %v356 = vpack.c.b16 %v352, %v351
        %vm361 = vcmask 523264
        %v363 = vsel %vm361, %v333, 0
        %v366 = vsel %vm361, %v334, 0
        %v369 = vsel %vm361, %v335, 0
        %v372 = vsel %vm361, %v336, 0
        %374 = vmatprep.subr.bf16.mxu0 0
        %375 = vmatpush1.bf16.msra.mxu0 0
        %376 = vmatprep.subr.bf16.mxu0 0
        %377 = vmatpush1.bf16.msra.mxu0 0
        %378 = vmatprep.subr.bf16.mxu0 0
        %379 = vmatpush1.bf16.msra.mxu0 0
        %380 = vmatprep.subr.bf16.mxu0 0
        %381 = vmatpush1.bf16.msra.mxu0 0
        %382 = vmatprep.subr.bf16.mxu0 0
        %383 = vmatpush1.bf16.msra.mxu0 %v356
        %384 = vmatprep.subr.bf16.mxu0 0
        %385 = vmatpush1.bf16.msra.mxu0 %v355
        %386 = vmatprep.subr.bf16.mxu0 0
        %387 = vmatpush1.bf16.msra.mxu0 %v354
        %388 = vmatprep.subr.bf16.mxu0 0
        %389 = vmatpush1.bf16.msra.mxu0 %v353
        %390 = vmatprep.subr.bf16.mxu0 0
        %391 = vmatpush2.bf16.msra.mxu0 0
        %392 = vmatprep.subr.bf16.mxu0 0
        %393 = vmatpush2.bf16.msra.mxu0 0
        %394 = vmatprep.subr.bf16.mxu0 0
        %395 = vmatpush2.bf16.msra.mxu0 0
        %396 = vmatprep.subr.bf16.mxu0 0
        %397 = vmatpush2.bf16.msra.mxu0 0
        %398 = vmatprep.subr.bf16.mxu0 0
        %399 = vmatpush2.bf16.msra.mxu0 0
        %400 = vmatprep.subr.bf16.mxu0 0
        %401 = vmatpush2.bf16.msra.mxu0 0
        %402 = vmatprep.subr.bf16.mxu0 0
        %403 = vmatpush2.bf16.msra.mxu0 0
        %404 = vmatprep.subr.bf16.mxu0 0
        %405 = vmatpush2.bf16.msra.mxu0 0
        %406 = vmatprep.mubr.bf16.mxu0 0
        %407 = vmatmul.mubr.bf16.gmra.mxu0 %v363
        %v408 = vpop.f32.mrf.mxu0
        %v409 = vadd.f32 0.0, %v408
        %v410 = vpop.f32.mrf.mxu0
        %v411 = vpop.f32.mrf.mxu0
        %v412 = vadd.f32 0.0, %v411
        %v413 = vpop.f32.mrf.mxu0
        %414 = vmatprep.mubr.bf16.mxu0 0
        %415 = vmatmul.mubr.bf16.gmra.mxu0 %v366
        %v416 = vpop.f32.mrf.mxu0
        %v417 = vadd.f32 0.0, %v416
        %v418 = vpop.f32.mrf.mxu0
        %v419 = vpop.f32.mrf.mxu0
        %v420 = vadd.f32 0.0, %v419
        %v421 = vpop.f32.mrf.mxu0
        %422 = vmatprep.mubr.bf16.mxu0 0
        %423 = vmatmul.mubr.bf16.gmra.mxu0 %v369
        %v424 = vpop.f32.mrf.mxu0
        %v425 = vadd.f32 0.0, %v424
        %v426 = vpop.f32.mrf.mxu0
        %v427 = vpop.f32.mrf.mxu0
        %v428 = vadd.f32 0.0, %v427
        %v429 = vpop.f32.mrf.mxu0
        %430 = vmatprep.mubr.bf16.mxu0 0
        %431 = vmatmul.mubr.bf16.gmra.mxu0 %v372
        %v432 = vpop.f32.mrf.mxu0
        %v433 = vadd.f32 0.0, %v432
        %v434 = vpop.f32.mrf.mxu0
        %v435 = vpop.f32.mrf.mxu0
        %v436 = vadd.f32 0.0, %v435
        %v437 = vpop.f32.mrf.mxu0
        %438 = vdwg.mxu0
        %v439 = vpack.c.bf16 %v412, %v409
        %v440 = vpack.c.bf16 %v420, %v417
        %v441 = vpack.c.bf16 %v428, %v425
        %v442 = vpack.c.bf16 %v436, %v433
        %v451 = vunpack.c.l.b16 %v288
        %v452 = vunpack.c.l.b16 %v289
        %v453 = vunpack.c.l.b16 %v290
        %v454 = vunpack.c.l.b16 %v291
        %v455 = vunpack.c.l.b16 %v292
        %v456 = vunpack.c.l.b16 %v293
        %v457 = vunpack.c.l.b16 %v294
        %v458 = vunpack.c.l.b16 %v295
        %v459 = vpack.c.b16 %v452, %v451
        %v460 = vpack.c.b16 %v454, %v453
        %v461 = vpack.c.b16 %v456, %v455
        %v462 = vpack.c.b16 %v458, %v457
        %471 = vrot.lane.b32.xlu0 %v409, 96
        %v472 = vpop.permute.xlu0 %471
        %473 = vrot.lane.b32.xlu0 %v412, 96
        %v474 = vpop.permute.xlu0 %473
        %475 = vrot.lane.b32.xlu0 %v417, 96
        %v476 = vpop.permute.xlu0 %475
        %477 = vrot.lane.b32.xlu0 %v420, 96
        %v478 = vpop.permute.xlu0 %477
        %479 = vrot.lane.b32.xlu0 %v425, 96
        %v480 = vpop.permute.xlu0 %479
        %481 = vrot.lane.b32.xlu0 %v428, 96
        %v482 = vpop.permute.xlu0 %481
        %483 = vrot.lane.b32.xlu0 %v433, 96
        %v484 = vpop.permute.xlu0 %483
        %485 = vrot.lane.b32.xlu0 %v436, 96
        %v486 = vpop.permute.xlu0 %485
        %v496 = vsel %vm361, %v459, 0
        %v499 = vsel %vm361, %v460, 0
        %v502 = vsel %vm361, %v461, 0
        %v505 = vsel %vm361, %v462, 0
        %507 = vmatprep.subr.bf16.mxu0 0
        %508 = vmatpush1.bf16.msra.mxu0 0
        %509 = vmatprep.subr.bf16.mxu0 0
        %510 = vmatpush1.bf16.msra.mxu0 0
        %511 = vmatprep.subr.bf16.mxu0 0
        %512 = vmatpush1.bf16.msra.mxu0 0
        %513 = vmatprep.subr.bf16.mxu0 0
        %514 = vmatpush1.bf16.msra.mxu0 0
        %515 = vmatprep.subr.bf16.mxu0 0
        %516 = vmatpush1.bf16.msra.mxu0 %v442
        %517 = vmatprep.subr.bf16.mxu0 0
        %518 = vmatpush1.bf16.msra.mxu0 %v441
        %519 = vmatprep.subr.bf16.mxu0 0
        %520 = vmatpush1.bf16.msra.mxu0 %v440
        %521 = vmatprep.subr.bf16.mxu0 0
        %522 = vmatpush1.bf16.msra.mxu0 %v439
        %523 = vmatprep.subr.bf16.mxu0 0
        %524 = vmatpush2.bf16.msra.mxu0 0
        %525 = vmatprep.subr.bf16.mxu0 0
        %526 = vmatpush2.bf16.msra.mxu0 0
        %527 = vmatprep.subr.bf16.mxu0 0
        %528 = vmatpush2.bf16.msra.mxu0 0
        %529 = vmatprep.subr.bf16.mxu0 0
        %530 = vmatpush2.bf16.msra.mxu0 0
        %531 = vmatprep.subr.bf16.mxu0 0
        %532 = vmatpush2.bf16.msra.mxu0 0
        %533 = vmatprep.subr.bf16.mxu0 0
        %534 = vmatpush2.bf16.msra.mxu0 0
        %535 = vmatprep.subr.bf16.mxu0 0
        %536 = vmatpush2.bf16.msra.mxu0 0
        %537 = vmatprep.subr.bf16.mxu0 0
        %538 = vmatpush2.bf16.msra.mxu0 0
        %539 = vmatprep.mubr.bf16.mxu0 0
        %540 = vmatmul.mubr.bf16.gmra.mxu0 %v496
        %v541 = vpop.f32.mrf.mxu0
        %v542 = vadd.f32 %v472, %v541
        %v543 = vpop.f32.mrf.mxu0
        %v544 = vpop.f32.mrf.mxu0
        %v545 = vadd.f32 %v474, %v544
        %v546 = vpop.f32.mrf.mxu0
        %547 = vmatprep.mubr.bf16.mxu0 0
        %548 = vmatmul.mubr.bf16.gmra.mxu0 %v499
        %v549 = vpop.f32.mrf.mxu0
        %v550 = vadd.f32 %v476, %v549
        %v551 = vpop.f32.mrf.mxu0
        %v552 = vpop.f32.mrf.mxu0
        %v553 = vadd.f32 %v478, %v552
        %v554 = vpop.f32.mrf.mxu0
        %555 = vmatprep.mubr.bf16.mxu0 0
        %556 = vmatmul.mubr.bf16.gmra.mxu0 %v502
        %v557 = vpop.f32.mrf.mxu0
        %v558 = vadd.f32 %v480, %v557
        %v559 = vpop.f32.mrf.mxu0
        %v560 = vpop.f32.mrf.mxu0
        %v561 = vadd.f32 %v482, %v560
        %v562 = vpop.f32.mrf.mxu0
        %563 = vmatprep.mubr.bf16.mxu0 0
        %564 = vmatmul.mubr.bf16.gmra.mxu0 %v505
        %v565 = vpop.f32.mrf.mxu0
        %v566 = vadd.f32 %v484, %v565
        %v567 = vpop.f32.mrf.mxu0
        %v568 = vpop.f32.mrf.mxu0
        %v569 = vadd.f32 %v486, %v568
        %v570 = vpop.f32.mrf.mxu0
        %571 = vdwg.mxu0
        %v572 = vlaneseq
        %v573 = vshrl.u32 %v572, 7
        %v574 = vsub.s32 0, %v573
        %v575 = vrot.slane %v316, %v574
        %v576 = vadd.f32 %v542, %v575
        %v577 = vadd.f32 %v545, %v575
        %v578 = vadd.f32 %v550, %v575
        %v579 = vadd.f32 %v553, %v575
        %v580 = vadd.f32 %v558, %v575
        %v581 = vadd.f32 %v561, %v575
        %v582 = vadd.f32 %v566, %v575
        %v583 = vadd.f32 %v569, %v575
        %v584 = vmax.f32 %v576, 0.0
        %v585 = vmax.f32 %v577, 0.0
        %v586 = vmax.f32 %v578, 0.0
        %v587 = vmax.f32 %v579, 0.0
        %v588 = vmax.f32 %v580, 0.0
        %v589 = vmax.f32 %v581, 0.0
        %v590 = vmax.f32 %v582, 0.0
        %v591 = vmax.f32 %v583, 0.0
        %vm592 = vcmask 261120
        %v594 = vsel %vm592, %v584, 0
        %v597 = vsel %vm592, %v585, 0
        %v600 = vsel %vm592, %v586, 0
        %v603 = vsel %vm592, %v587, 0
        %v606 = vsel %vm592, %v588, 0
        %v609 = vsel %vm592, %v589, 0
        %v612 = vsel %vm592, %v590, 0
        %v615 = vsel %vm592, %v591, 0
        %617 = vmatprep.subr.mxu0 0.0
        %618 = vmatpush1.msra.mxu0 0.0
        %619 = vmatprep.subr.mxu0 0.0
        %620 = vmatpush1.msra.mxu0 0.0
        %621 = vmatprep.subr.mxu0 0.0
        %622 = vmatpush1.msra.mxu0 0.0
        %623 = vmatprep.subr.mxu0 0.0
        %624 = vmatpush1.msra.mxu0 0.0
        %625 = vmatprep.subr.mxu0 0.0
        %626 = vmatpush1.msra.mxu0 0.0
        %627 = vmatprep.subr.mxu0 0.0
        %628 = vmatpush1.msra.mxu0 0.0
        %629 = vmatprep.subr.mxu0 0.0
        %630 = vmatpush1.msra.mxu0 0.0
        %631 = vmatprep.subr.mxu0 0.0
        %632 = vmatpush1.msra.mxu0 0.0
        %633 = vmatprep.subr.mxu0 0.0
        %634 = vmatpush1.msra.mxu0 0.0
        %635 = vmatprep.subr.mxu0 0.0
        %636 = vmatpush1.msra.mxu0 0.0
        %637 = vmatprep.subr.mxu0 0.0
        %638 = vmatpush1.msra.mxu0 0.0
        %639 = vmatprep.subr.mxu0 0.0
        %640 = vmatpush1.msra.mxu0 0.0
        %641 = vmatprep.subr.mxu0 0.0
        %642 = vmatpush1.msra.mxu0 %v315
        %643 = vmatprep.subr.mxu0 0.0
        %644 = vmatpush1.msra.mxu0 %v314
        %645 = vmatprep.subr.mxu0 0.0
        %646 = vmatpush1.msra.mxu0 %v313
        %647 = vmatprep.subr.mxu0 0.0
        %648 = vmatpush1.msra.mxu0 %v312
        %649 = vmatprep.subr.mxu0 0.0
        %650 = vmatpush2.msra.mxu0 0.0
        %651 = vmatprep.subr.mxu0 0.0
        %652 = vmatpush2.msra.mxu0 0.0
        %653 = vmatprep.subr.mxu0 0.0
        %654 = vmatpush2.msra.mxu0 0.0
        %655 = vmatprep.subr.mxu0 0.0
        %656 = vmatpush2.msra.mxu0 0.0
        %657 = vmatprep.subr.mxu0 0.0
        %658 = vmatpush2.msra.mxu0 0.0
        %659 = vmatprep.subr.mxu0 0.0
        %660 = vmatpush2.msra.mxu0 0.0
        %661 = vmatprep.subr.mxu0 0.0
        %662 = vmatpush2.msra.mxu0 0.0
        %663 = vmatprep.subr.mxu0 0.0
        %664 = vmatpush2.msra.mxu0 0.0
        %665 = vmatprep.subr.mxu0 0.0
        %666 = vmatpush2.msra.mxu0 0.0
        %667 = vmatprep.subr.mxu0 0.0
        %668 = vmatpush2.msra.mxu0 0.0
        %669 = vmatprep.subr.mxu0 0.0
        %670 = vmatpush2.msra.mxu0 0.0
        %671 = vmatprep.subr.mxu0 0.0
        %672 = vmatpush2.msra.mxu0 0.0
        %673 = vmatprep.subr.mxu0 0.0
        %674 = vmatpush2.msra.mxu0 0.0
        %675 = vmatprep.subr.mxu0 0.0
        %676 = vmatpush2.msra.mxu0 0.0
        %677 = vmatprep.subr.mxu0 0.0
        %678 = vmatpush2.msra.mxu0 0.0
        %679 = vmatprep.subr.mxu0 0.0
        %680 = vmatpush2.msra.mxu0 0.0
        %681 = vmatprep.mubr.f32.mxu0 0.0
        %682 = vmatmul.mubr.f32.gmra.mxu0 %v594
        %v683 = vpop.f32.mrf.mxu0
        %v684 = vadd.f32 0.0, %v683
        %v685 = vpop.f32.mrf.mxu0
        %686 = vmatprep.mubr.f32.mxu0 0.0
        %687 = vmatmul.mubr.f32.gmra.mxu0 %v597
        %v688 = vpop.f32.mrf.mxu0
        %v689 = vadd.f32 0.0, %v688
        %v690 = vpop.f32.mrf.mxu0
        %691 = vmatprep.mubr.f32.mxu0 0.0
        %692 = vmatmul.mubr.f32.gmra.mxu0 %v600
        %v693 = vpop.f32.mrf.mxu0
        %v694 = vadd.f32 0.0, %v693
        %v695 = vpop.f32.mrf.mxu0
        %696 = vmatprep.mubr.f32.mxu0 0.0
        %697 = vmatmul.mubr.f32.gmra.mxu0 %v603
        %v698 = vpop.f32.mrf.mxu0
        %v699 = vadd.f32 0.0, %v698
        %v700 = vpop.f32.mrf.mxu0
        %701 = vmatprep.mubr.f32.mxu0 0.0
        %702 = vmatmul.mubr.f32.gmra.mxu0 %v606
        %v703 = vpop.f32.mrf.mxu0
        %v704 = vadd.f32 0.0, %v703
        %v705 = vpop.f32.mrf.mxu0
        %706 = vmatprep.mubr.f32.mxu0 0.0
        %707 = vmatmul.mubr.f32.gmra.mxu0 %v609
        %v708 = vpop.f32.mrf.mxu0
        %v709 = vadd.f32 0.0, %v708
        %v710 = vpop.f32.mrf.mxu0
        %711 = vmatprep.mubr.f32.mxu0 0.0
        %712 = vmatmul.mubr.f32.gmra.mxu0 %v612
        %v713 = vpop.f32.mrf.mxu0
        %v714 = vadd.f32 0.0, %v713
        %v715 = vpop.f32.mrf.mxu0
        %716 = vmatprep.mubr.f32.mxu0 0.0
        %717 = vmatmul.mubr.f32.gmra.mxu0 %v615
        %v718 = vpop.f32.mrf.mxu0
        %v719 = vadd.f32 0.0, %v718
        %v720 = vpop.f32.mrf.mxu0
        %721 = vdwg.mxu0
        %v722 = vpack.c.bf16 %v689, %v684
        %v723 = vpack.c.bf16 %v699, %v694
        %v724 = vpack.c.bf16 %v709, %v704
        %v725 = vpack.c.bf16 %v719, %v714
        %734 = vrot.lane.b32.xlu0 %v684, 127
        %v735 = vpop.permute.xlu0 %734
        %736 = vrot.lane.b32.xlu0 %v689, 127
        %v737 = vpop.permute.xlu0 %736
        %738 = vrot.lane.b32.xlu0 %v694, 127
        %v739 = vpop.permute.xlu0 %738
        %740 = vrot.lane.b32.xlu0 %v699, 127
        %v741 = vpop.permute.xlu0 %740
        %742 = vrot.lane.b32.xlu0 %v704, 127
        %v743 = vpop.permute.xlu0 %742
        %744 = vrot.lane.b32.xlu0 %v709, 127
        %v745 = vpop.permute.xlu0 %744
        %746 = vrot.lane.b32.xlu0 %v714, 127
        %v747 = vpop.permute.xlu0 %746
        %748 = vrot.lane.b32.xlu0 %v719, 127
        %v749 = vpop.permute.xlu0 %748
        %758 = vmatprep.subr.bf16.mxu0 0
        %759 = vmatpush1.bf16.msra.mxu0 0
        %760 = vmatprep.subr.bf16.mxu0 0
        %761 = vmatpush1.bf16.msra.mxu0 0
        %762 = vmatprep.subr.bf16.mxu0 0
        %763 = vmatpush1.bf16.msra.mxu0 0
        %764 = vmatprep.subr.bf16.mxu0 0
        %765 = vmatpush1.bf16.msra.mxu0 0
        %766 = vmatprep.subr.bf16.mxu0 0
        %767 = vmatpush1.bf16.msra.mxu0 %v725
        %768 = vmatprep.subr.bf16.mxu0 0
        %769 = vmatpush1.bf16.msra.mxu0 %v724
        %770 = vmatprep.subr.bf16.mxu0 0
        %771 = vmatpush1.bf16.msra.mxu0 %v723
        %772 = vmatprep.subr.bf16.mxu0 0
        %773 = vmatpush1.bf16.msra.mxu0 %v722
        %774 = vmatprep.subr.bf16.mxu0 0
        %775 = vmatpush2.bf16.msra.mxu0 0
        %776 = vmatprep.subr.bf16.mxu0 0
        %777 = vmatpush2.bf16.msra.mxu0 0
        %778 = vmatprep.subr.bf16.mxu0 0
        %779 = vmatpush2.bf16.msra.mxu0 0
        %780 = vmatprep.subr.bf16.mxu0 0
        %781 = vmatpush2.bf16.msra.mxu0 0
        %782 = vmatprep.subr.bf16.mxu0 0
        %783 = vmatpush2.bf16.msra.mxu0 0
        %784 = vmatprep.subr.bf16.mxu0 0
        %785 = vmatpush2.bf16.msra.mxu0 0
        %786 = vmatprep.subr.bf16.mxu0 0
        %787 = vmatpush2.bf16.msra.mxu0 0
        %788 = vmatprep.subr.bf16.mxu0 0
        %789 = vmatpush2.bf16.msra.mxu0 0
        %790 = vmatprep.mubr.bf16.mxu0 0
        %791 = vmatmul.mubr.bf16.gmra.mxu0 %v496
        %v792 = vpop.f32.mrf.mxu0
        %v793 = vadd.f32 %v735, %v792
        %v794 = vpop.f32.mrf.mxu0
        %v795 = vpop.f32.mrf.mxu0
        %v796 = vadd.f32 %v737, %v795
        %v797 = vpop.f32.mrf.mxu0
        %798 = vmatprep.mubr.bf16.mxu0 0
        %799 = vmatmul.mubr.bf16.gmra.mxu0 %v499
        %v800 = vpop.f32.mrf.mxu0
        %v801 = vadd.f32 %v739, %v800
        %v802 = vpop.f32.mrf.mxu0
        %v803 = vpop.f32.mrf.mxu0
        %v804 = vadd.f32 %v741, %v803
        %v805 = vpop.f32.mrf.mxu0
        %806 = vmatprep.mubr.bf16.mxu0 0
        %807 = vmatmul.mubr.bf16.gmra.mxu0 %v502
        %v808 = vpop.f32.mrf.mxu0
        %v809 = vadd.f32 %v743, %v808
        %v810 = vpop.f32.mrf.mxu0
        %v811 = vpop.f32.mrf.mxu0
        %v812 = vadd.f32 %v745, %v811
        %v813 = vpop.f32.mrf.mxu0
        %814 = vmatprep.mubr.bf16.mxu0 0
        %815 = vmatmul.mubr.bf16.gmra.mxu0 %v505
        %v816 = vpop.f32.mrf.mxu0
        %v817 = vadd.f32 %v747, %v816
        %v818 = vpop.f32.mrf.mxu0
        %v819 = vpop.f32.mrf.mxu0
        %v820 = vadd.f32 %v749, %v819
        %v821 = vpop.f32.mrf.mxu0
        %822 = vdwg.mxu0
        %824 = vrot.lane.b32.xlu0 %v575, 96
        %v825 = vpop.permute.xlu0 %824
        %v827 = vadd.f32 %v793, %v825
        %v828 = vadd.f32 %v796, %v825
        %v829 = vadd.f32 %v801, %v825
        %v830 = vadd.f32 %v804, %v825
        %v831 = vadd.f32 %v809, %v825
        %v832 = vadd.f32 %v812, %v825
        %v833 = vadd.f32 %v817, %v825
        %v834 = vadd.f32 %v820, %v825
        %v835 = vxor.u32 %v827, 2147483648
        %v836 = vxor.u32 %v828, 2147483648
        %v837 = vxor.u32 %v829, 2147483648
        %v838 = vxor.u32 %v830, 2147483648
        %v839 = vxor.u32 %v831, 2147483648
        %v840 = vxor.u32 %v832, 2147483648
        %v841 = vxor.u32 %v833, 2147483648
        %v842 = vxor.u32 %v834, 2147483648
        %v843 = vmul.f32 %v835, 1.442695
        %v844 = vpow.pop %v843
        %v845 = vmul.f32 %v836, 1.442695
        %v846 = vpow.pop %v845
        %v847 = vmul.f32 %v837, 1.442695
        %v848 = vpow.pop %v847
        %v849 = vmul.f32 %v838, 1.442695
        %v850 = vpow.pop %v849
        %v851 = vmul.f32 %v839, 1.442695
        %v852 = vpow.pop %v851
        %v853 = vmul.f32 %v840, 1.442695
        %v854 = vpow.pop %v853
        %v855 = vmul.f32 %v841, 1.442695
        %v856 = vpow.pop %v855
        %v857 = vmul.f32 %v842, 1.442695
        %v858 = vpow.pop %v857
        %v859 = vadd.f32 %v844, 1.0
        %v860 = vadd.f32 %v846, 1.0
        %v861 = vadd.f32 %v848, 1.0
        %v862 = vadd.f32 %v850, 1.0
        %v863 = vadd.f32 %v852, 1.0
        %v864 = vadd.f32 %v854, 1.0
        %v865 = vadd.f32 %v856, 1.0
        %v866 = vadd.f32 %v858, 1.0
        %v867 = vrcp.pop %v859
        %v868 = vmul.f32 1.0, %v867
        %v869 = vrcp.pop %v860
        %v870 = vmul.f32 1.0, %v869
        %v871 = vrcp.pop %v861
        %v872 = vmul.f32 1.0, %v871
        %v873 = vrcp.pop %v862
        %v874 = vmul.f32 1.0, %v873
        %v875 = vrcp.pop %v863
        %v876 = vmul.f32 1.0, %v875
        %v877 = vrcp.pop %v864
        %v878 = vmul.f32 1.0, %v877
        %v879 = vrcp.pop %v865
        %v880 = vmul.f32 1.0, %v879
        %v881 = vrcp.pop %v866
        %v882 = vmul.f32 1.0, %v881
        %884 = vset.pattern.permute.xlu0 0
        %885 = vperm.xlu0 %884, %v868
        %v886 = vpop.permute.xlu0 %885
        %889 = vset.pattern.permute.xlu0 0
        %890 = vperm.xlu0 %889, %v870
        %v891 = vpop.permute.xlu0 %890
        %894 = vset.pattern.permute.xlu0 0
        %895 = vperm.xlu0 %894, %v872
        %v896 = vpop.permute.xlu0 %895
        %899 = vset.pattern.permute.xlu0 0
        %900 = vperm.xlu0 %899, %v874
        %v901 = vpop.permute.xlu0 %900
        %904 = vset.pattern.permute.xlu0 0
        %905 = vperm.xlu0 %904, %v876
        %v906 = vpop.permute.xlu0 %905
        %909 = vset.pattern.permute.xlu0 0
        %910 = vperm.xlu0 %909, %v878
        %v911 = vpop.permute.xlu0 %910
        %914 = vset.pattern.permute.xlu0 0
        %915 = vperm.xlu0 %914, %v880
        %v916 = vpop.permute.xlu0 %915
        %919 = vset.pattern.permute.xlu0 0
        %920 = vperm.xlu0 %919, %v882
        %v921 = vpop.permute.xlu0 %920
        %923 = vst [vmem:[%s286] sm:$0xff] %v886
        %924 = vst [vmem:[%s286 + $0x8] sm:$0xff] %v891
        %925 = vst [vmem:[%s286 + $0x10] sm:$0xff] %v896
        %926 = vst [vmem:[%s286 + $0x18] sm:$0xff] %v901
        %927 = vst [vmem:[%s286 + $0x20] sm:$0xff] %v906
        %928 = vst [vmem:[%s286 + $0x28] sm:$0xff] %v911
        %929 = vst [vmem:[%s286 + $0x30] sm:$0xff] %v916
        %930 = vst [vmem:[%s286 + $0x38] sm:$0xff] %v921
        %p931 = scmp.lt.s32.totalorder %s22, 3
        %s932 = scalar_select %p931, %s22, 3
        %s933 = smul.addr %s932, 8
        %s934 = smul.addr %s933, 8
        %s935 = scalar_lea.vmem %s4, %s934
        // Predicated region
        $region53: #{gnn_pallas_forward.1} parent=35 // pred_check
          %p936 = pneg %p134
        $region54: #{gnn_pallas_forward.1} parent=35 // pred_check_branch
          %938 = sbr.rel (%p936) target = $region56
        $region55: #{gnn_pallas_forward.1} parent=35 // pred_region
          _
        $region56: #{gnn_pallas_forward.1} parent=35 // pred_fallthru
          _
      $region36: #{gnn_pallas_forward.1} parent=5 // pred_fallthru
        _
      %p939 = scmp.le.s32.totalorder 2, %s17
      // Predicated region
      $region57: #{gnn_pallas_forward.1} parent=5 // pred_check
        %p940 = pneg %p939
      $region58: #{gnn_pallas_forward.1} parent=5 // pred_check_branch
        %942 = sbr.rel (%p940) target = $region60
      $region59: #{gnn_pallas_forward.1} parent=5 // pred_region
        %s943 = ssub.s32 %s17, 2
        // Predicated region
        $region61: #{gnn_pallas_forward.1} parent=59 // pred_check
          %p944 = pneg %p140
        $region62: #{gnn_pallas_forward.1} parent=59 // pred_check_branch
          %946 = sbr.rel (%p944) target = $region64
        $region63: #{gnn_pallas_forward.1} parent=59 // pred_region
          %p947 = scmp.lt.s32.totalorder %s23, 3
          %s948 = scalar_select %p947, %s23, 3
          %s949 = smul.addr %s948, 8
          %s950 = smul.addr %s949, 8
          %s951 = scalar_lea.vmem %s4, %s950
        $region64: #{gnn_pallas_forward.1} parent=59 // pred_fallthru
          _
      $region60: #{gnn_pallas_forward.1} parent=5 // pred_fallthru
        _
    $region6: #{gnn_pallas_forward.1} parent=1 // loop_footer
      %s21 = sadd.s32 1, %s17
    $region7: #{gnn_pallas_forward.1} parent=1 // loop_footer_branch
      %16 = sbr.rel target = $region3
    $region8: #{gnn_pallas_forward.1} parent=1 // loop_exit
      _
    %952 = vsyncpa [#allocation3], 1
    %s953 = scalar_lea.sflag [#allocation3], 1
    %954 = vsyncpa %s953, 1
    %955 = vsyncpa [#allocation5], 1
    %s956 = scalar_lea.sflag [#allocation5], 1
    %957 = vsyncpa %s956, 1
    %958 = vsyncpa [#allocation8], 1

</llo_original>
